<compile_context>
chip_gen: v6e
topology: v6e:2x2x1
jax: 0.10.0
libtpu: 0.0.40
codegen_flags: <defaults>
</compile_context>

<pallas_src>
import functools

import jax
import jax.numpy as jnp
from jax import lax
from jax.experimental import pallas as pl
from jax.experimental.pallas import tpu as pltpu


def _uv_sample_kernel(uv_ref, fmap_ref, out_ref, acc_ref, *, H):
    """One (player, n-tile, h-chunk) grid step.

    uv_ref:   (2, TN)      row 0 = x (width coord), row 1 = y (height coord), in [-1, 1]
    fmap_ref: (C, th, W)   h-chunk of this player's feature map (native dtype)
    out_ref:  (C, TN)      written on the last h-chunk
    acc_ref:  (C, TN) f32  accumulator scratch, persists across h-chunks
    """
    C, th, W = fmap_ref.shape
    TN = uv_ref.shape[1]
    h_idx = pl.program_id(2)

    @pl.when(h_idx == 0)
    def _():
        acc_ref[...] = jnp.zeros_like(acc_ref)

    uv = uv_ref[...].astype(jnp.float32)
    x = uv[0:1, :]                       # (1, TN)
    y = uv[1:2, :]                       # (1, TN)

    # align_corners=False unnormalization (PyTorch grid_sample semantics)
    ix = ((x + 1.0) * W - 1.0) * 0.5
    iy = ((y + 1.0) * H - 1.0) * 0.5
    x0f = jnp.floor(ix)
    y0f = jnp.floor(iy)
    fx = ix - x0f
    fy = iy - y0f
    x0 = x0f.astype(jnp.int32)
    y0 = y0f.astype(jnp.int32)
    x1 = x0 + 1
    y1 = y0 + 1

    # Factorized one-hot bilinear weights. Out-of-range x0/x1/y0/y1 match no iota row,
    # so padding_mode='zeros' falls out for free (no clip / validity masks).
    cdt = fmap_ref.dtype  # MXU compute dtype (bf16 stays bf16; accumulation is f32)
    iota_w = lax.broadcasted_iota(jnp.int32, (W, TN), 0)
    wx = ((iota_w == x0).astype(jnp.float32) * (1.0 - fx)
          + (iota_w == x1).astype(jnp.float32) * fx).astype(cdt)        # (W, TN)

    h0 = h_idx * th
    iota_h = h0 + lax.broadcasted_iota(jnp.int32, (th, TN), 0)
    wy = ((iota_h == y0).astype(jnp.float32) * (1.0 - fy)
          + (iota_h == y1).astype(jnp.float32) * fy)                     # (th, TN) f32

    # Stage 1 (MXU): contract over W. (C, th, W) -> (C*th, W) is layout-free when
    # th % 8 == 0 (always true for the module's power-of-two resolutions).
    fmap = fmap_ref[...].reshape(C * th, W)
    tmp = jnp.dot(fmap, wx, preferred_element_type=jnp.float32)          # (C*th, TN) f32

    # Stage 2 (VPU): weight rows by wy and reduce over this h-chunk.
    part = jnp.sum(tmp.reshape(C, th, TN) * wy[None, :, :], axis=1)      # (C, TN) f32
    acc_ref[...] += part

    @pl.when(h_idx == pl.num_programs(2) - 1)
    def _():
        out_ref[...] = acc_ref[...].astype(out_ref.dtype)


def _vmem_bytes_estimate(C, th, W, tile_n, fmap_itemsize, out_itemsize):
    fmap_buf = 2 * C * th * W * fmap_itemsize            # double-buffered fmap chunk
    uv_buf = 2 * 2 * tile_n * 4                          # double-buffered uv block
    out_buf = 2 * C * tile_n * out_itemsize              # double-buffered out block
    acc = C * tile_n * 4                                 # f32 accumulator scratch
    # in-kernel temporaries: tmp + broadcast product (each ~C*th*TN f32) + wx/wy/one-hots
    interm = (2 * C * th + 2 * W + 2 * th + 16) * tile_n * 4
    return fmap_buf + uv_buf + out_buf + acc + interm


def _auto_h_chunk(C, H, W, tile_n, fmap_itemsize, budget_bytes=24 * 1024 * 1024):
    """Pick the largest H chunk that keeps per-step VMEM residency under budget."""
    th = H
    if H % 8 != 0:
        return H  # chunking requires th % 8 == 0 for clean (8,128) tiling
    while (th > 8
           and _vmem_bytes_estimate(C, th, W, tile_n, fmap_itemsize, fmap_itemsize) > budget_bytes
           and th % 2 == 0
           and H % (th // 2) == 0
           and (th // 2) % 8 == 0):
        th //= 2
    return th


def uv_encoder_forward(feature_map, uvs, *, tile_n=256, h_chunk=None,
                       channel_major_output=False):
    """feature_map: [P, C, H, W] (NCHW), uvs: [P, N, 2] in [-1, 1].

    Returns [P, N, C] (module semantics), or [P, C, N] if channel_major_output=True.
    """
    P, C, H, W = feature_map.shape
    _, N, _ = uvs.shape

    # Cheap glue: transpose only the tiny uv tensor so uv blocks are lane-dense in N.
    uvs_t = jnp.transpose(uvs, (0, 2, 1))                     # [P, 2, N]

    n_tiles = pl.cdiv(N, tile_n)
    n_pad = n_tiles * tile_n
    if n_pad != N:
        # padded samples land outside [-1, 1] -> they sample to zero; sliced away below
        uvs_t = jnp.pad(uvs_t, ((0, 0), (0, 0), (0, n_pad - N)), constant_values=-2.0)

    fmap_itemsize = jnp.dtype(feature_map.dtype).itemsize
    if h_chunk is None:
        th = _auto_h_chunk(C, H, W, tile_n, fmap_itemsize)
    else:
        th = int(h_chunk)
        assert H % th == 0 and (th == H or th % 8 == 0), "h_chunk must divide H (mult of 8)"
    n_h = H // th

    est = _vmem_bytes_estimate(C, th, W, tile_n, fmap_itemsize, fmap_itemsize)
    vmem_limit = int(min(128 * 1024 * 1024, max(32 * 1024 * 1024, int(1.5 * est))))

    kernel = functools.partial(_uv_sample_kernel, H=H)

    out_cn = pl.pallas_call(
        kernel,
        out_shape=jax.ShapeDtypeStruct((P, C, n_pad), feature_map.dtype),
        grid_spec=pltpu.PrefetchScalarGridSpec(
            num_scalar_prefetch=0,
            grid=(P, n_tiles, n_h),
            in_specs=[
                # uv block: constant across h -> DMA'd once per (p, t)
                pl.BlockSpec((None, 2, tile_n), lambda p, t, h: (p, 0, t)),
                # fmap chunk: when n_h == 1 the index is constant across t and h,
                # so it is fetched exactly once per player
                pl.BlockSpec((None, C, th, W), lambda p, t, h: (p, 0, h, 0)),
            ],
            out_specs=pl.BlockSpec((None, C, tile_n), lambda p, t, h: (p, 0, t)),
            scratch_shapes=[pltpu.VMEM((C, tile_n), jnp.float32)],
        ),
        compiler_params=pltpu.CompilerParams(
            dimension_semantics=("parallel", "arbitrary", "arbitrary"),
            vmem_limit_bytes=vmem_limit,
        ),
    )(uvs_t, feature_map)

    out_cn = out_cn[:, :, :N] if n_pad != N else out_cn
    if channel_major_output:
        return out_cn                                   # [P, C, N], lane-dense
    # small wrapper-side transpose to match the torch module's [P, N, C] output layout
    return jnp.transpose(out_cn, (0, 2, 1))


def _reference_forward(feature_map, uvs):
    """Pure-JAX reference of F.grid_sample(fm, uvs[:,:,None,:], align_corners=False)
       .transpose(1,3).reshape(P, -1, C)."""
    P, C, H, W = feature_map.shape
    x = uvs[..., 0]
    y = uvs[..., 1]
    ix = ((x + 1.0) * W - 1.0) * 0.5
    iy = ((y + 1.0) * H - 1.0) * 0.5
    x0 = jnp.floor(ix).astype(jnp.int32)
    y0 = jnp.floor(iy).astype(jnp.int32)
    fx = ix - x0
    fy = iy - y0

    def gather(xi, yi):
        valid = ((xi >= 0) & (xi < W) & (yi >= 0) & (yi < H)).astype(feature_map.dtype)
        xi_c = jnp.clip(xi, 0, W - 1)
        yi_c = jnp.clip(yi, 0, H - 1)
        vals = jax.vmap(lambda fm, yy, xx: fm[:, yy, xx].T)(feature_map, yi_c, xi_c)
        return vals * valid[..., None]

    w00 = ((1 - fx) * (1 - fy))[..., None]
    w10 = (fx * (1 - fy))[..., None]
    w01 = ((1 - fx) * fy)[..., None]
    w11 = (fx * fy)[..., None]
    return (gather(x0, y0) * w00 + gather(x0 + 1, y0) * w10
            + gather(x0, y0 + 1) * w01 + gather(x0 + 1, y0 + 1) * w11)


if __name__ == "__main__":
    # small, UVEncoder-consistent shapes
    num_players = 2
    num_channels = 8
    resolution = 16
    num_points = 200          # not a multiple of tile_n -> exercises cdiv + padding path

    key = jax.random.PRNGKey(0)
    k_fm, k_uv = jax.random.split(key)

    # module inits the parameter to zeros; use normal so the test is non-trivial
    feature_map = jax.random.normal(
        k_fm, (num_players, num_channels, resolution, resolution), dtype=jnp.float32)
    # uv samples slightly outside [-1, 1] to exercise zeros padding
    uvs = jax.random.uniform(
        k_uv, (num_players, num_points, 2), minval=-1.1, maxval=1.1, dtype=jnp.float32)

    ref = _reference_forward(feature_map, uvs)

    # 1) default path: single H chunk, fmap fetched once per player
    out = jax.block_until_ready(uv_encoder_forward(feature_map, uvs))
    assert out.shape == (num_players, num_points, num_channels)
    assert jnp.allclose(out, ref, atol=1e-4, rtol=1e-4), "f32 mismatch vs reference"

    # 2) spatially-chunked accumulator path (forced h_chunk < H)
    out_chunked = jax.block_until_ready(uv_encoder_forward(feature_map, uvs, h_chunk=8))
    assert jnp.allclose(out_chunked, ref, atol=1e-4, rtol=1e-4), "chunked mismatch"

    # 3) bf16 feature map: half the fmap DMA bytes, bf16 MXU, f32 accumulation
    out_bf16 = jax.block_until_ready(
        uv_encoder_forward(feature_map.astype(jnp.bfloat16), uvs))
    assert out_bf16.dtype == jnp.bfloat16
    max_err = float(jnp.max(jnp.abs(out_bf16.astype(jnp.float32) - ref)))
    assert max_err < 0.3, f"bf16 path max abs err {max_err}"

    print("KERNEL_OK")
</pallas_src>

<mosaic_0001>
module attributes {stable_mosaic.version = 11 : i64} {
  func.func @_uv_sample_kernel(%arg0: i32, %arg1: i32, %arg2: i32, %arg3: memref<1x2x256xf32, #tpu.memory_space<vmem>>, %arg4: memref<1x8x16x16xf32, #tpu.memory_space<vmem>>, %arg5: memref<1x8x256xf32, #tpu.memory_space<vmem>>, %arg6: memref<8x256xf32, #tpu.memory_space<vmem>>) attributes {dimension_semantics = [#tpu.dimension_semantics<parallel>, #tpu.dimension_semantics<arbitrary>, #tpu.dimension_semantics<arbitrary>], iteration_bounds = array<i64: 2, 1, 1>, scalar_prefetch = 0 : i64, scratch_operands = 1 : i64, tpu.core_type = #tpu.core_type<tc>, window_params = [{transform_indices = @transform_0, window_bounds = array<i64: 1, 2, 256>}, {transform_indices = @transform_1, window_bounds = array<i64: 1, 8, 16, 16>}, {transform_indices = @transform_2, window_bounds = array<i64: 1, 8, 256>}]} {
    %c0_i32 = arith.constant 0 : i32
    %0 = arith.cmpi eq, %arg2, %c0_i32 : i32
    %1 = arith.extui %0 : i1 to i32
    %c0_i32_0 = arith.constant 0 : i32
    %2 = arith.cmpi ne, %1, %c0_i32_0 : i32
    scf.if %2 {
      %cst_25 = arith.constant 0.000000e+00 : f32
      %83 = vector.broadcast %cst_25 : f32 to vector<8x256xf32>
      %c0_26 = arith.constant 0 : index
      %c0_27 = arith.constant 0 : index
      %84 = vector.load %arg6[%c0_26, %c0_27] : memref<8x256xf32, #tpu.memory_space<vmem>>, vector<8x256xf32>
      tpu.vector_store %arg6[%c0_26, %c0_27], %83 {strides = array<i32>} : memref<8x256xf32, #tpu.memory_space<vmem>>, vector<8x256xf32>,
    } else {
    }
    %c0 = arith.constant 0 : index
    %c0_1 = arith.constant 0 : index
    %c0_2 = arith.constant 0 : index
    %3 = vector.load %arg3[%c0, %c0_1, %c0_2] : memref<1x2x256xf32, #tpu.memory_space<vmem>>, vector<1x2x256xf32>
    %4 = vector.shape_cast %3 : vector<1x2x256xf32> to vector<2x256xf32>
    %5 = vector.extract_strided_slice %4 {offsets = [0, 0], sizes = [1, 256], strides = [1, 1]} : vector<2x256xf32> to vector<1x256xf32>
    %6 = vector.extract_strided_slice %4 {offsets = [1, 0], sizes = [1, 256], strides = [1, 1]} : vector<2x256xf32> to vector<1x256xf32>
    %cst = arith.constant 1.000000e+00 : f32
    %7 = vector.broadcast %cst : f32 to vector<1x256xf32>
    %8 = arith.addf %5, %7 : vector<1x256xf32>
    %cst_3 = arith.constant 1.600000e+01 : f32
    %9 = vector.broadcast %cst_3 : f32 to vector<1x256xf32>
    %10 = arith.mulf %8, %9 : vector<1x256xf32>
    %cst_4 = arith.constant 1.000000e+00 : f32
    %11 = vector.broadcast %cst_4 : f32 to vector<1x256xf32>
    %12 = arith.subf %10, %11 : vector<1x256xf32>
    %cst_5 = arith.constant 5.000000e-01 : f32
    %13 = vector.broadcast %cst_5 : f32 to vector<1x256xf32>
    %14 = arith.mulf %12, %13 : vector<1x256xf32>
    %cst_6 = arith.constant 1.000000e+00 : f32
    %15 = vector.broadcast %cst_6 : f32 to vector<1x256xf32>
    %16 = arith.addf %6, %15 : vector<1x256xf32>
    %cst_7 = arith.constant 1.600000e+01 : f32
    %17 = vector.broadcast %cst_7 : f32 to vector<1x256xf32>
    %18 = arith.mulf %16, %17 : vector<1x256xf32>
    %cst_8 = arith.constant 1.000000e+00 : f32
    %19 = vector.broadcast %cst_8 : f32 to vector<1x256xf32>
    %20 = arith.subf %18, %19 : vector<1x256xf32>
    %cst_9 = arith.constant 5.000000e-01 : f32
    %21 = vector.broadcast %cst_9 : f32 to vector<1x256xf32>
    %22 = arith.mulf %20, %21 : vector<1x256xf32>
    %23 = math.floor %14 : vector<1x256xf32>
    %24 = math.floor %22 : vector<1x256xf32>
    %25 = arith.subf %14, %23 : vector<1x256xf32>
    %26 = arith.subf %22, %24 : vector<1x256xf32>
    %27 = arith.fptosi %23 : vector<1x256xf32> to vector<1x256xi32>
    %28 = arith.fptosi %24 : vector<1x256xf32> to vector<1x256xi32>
    %c1_i32 = arith.constant 1 : i32
    %29 = vector.broadcast %c1_i32 : i32 to vector<1x256xi32>
    %30 = arith.addi %27, %29 : vector<1x256xi32>
    %c1_i32_10 = arith.constant 1 : i32
    %31 = vector.broadcast %c1_i32_10 : i32 to vector<1x256xi32>
    %32 = arith.addi %28, %31 : vector<1x256xi32>
    %33 = tpu.iota {dimensions = array<i32: 0>} : vector<16x256xi32>
    %34 = vector.broadcast %27 : vector<1x256xi32> to vector<16x256xi32>
    %35 = arith.cmpi eq, %33, %34 : vector<16x256xi32>
    %36 = arith.extui %35 : vector<16x256xi1> to vector<16x256xi32>
    %37 = arith.sitofp %36 : vector<16x256xi32> to vector<16x256xf32>
    %cst_11 = arith.constant 1.000000e+00 : f32
    %38 = vector.broadcast %cst_11 : f32 to vector<1x256xf32>
    %39 = arith.subf %38, %25 : vector<1x256xf32>
    %40 = vector.broadcast %39 : vector<1x256xf32> to vector<16x256xf32>
    %41 = arith.mulf %37, %40 : vector<16x256xf32>
    %42 = vector.broadcast %30 : vector<1x256xi32> to vector<16x256xi32>
    %43 = arith.cmpi eq, %33, %42 : vector<16x256xi32>
    %44 = arith.extui %43 : vector<16x256xi1> to vector<16x256xi32>
    %45 = arith.sitofp %44 : vector<16x256xi32> to vector<16x256xf32>
    %46 = vector.broadcast %25 : vector<1x256xf32> to vector<16x256xf32>
    %47 = arith.mulf %45, %46 : vector<16x256xf32>
    %48 = arith.addf %41, %47 : vector<16x256xf32>
    %c16_i32 = arith.constant 16 : i32
    %49 = arith.muli %arg2, %c16_i32 : i32
    %50 = tpu.iota {dimensions = array<i32: 0>} : vector<16x256xi32>
    %51 = vector.broadcast %49 : i32 to vector<16x256xi32>
    %52 = arith.addi %51, %50 : vector<16x256xi32>
    %53 = vector.broadcast %28 : vector<1x256xi32> to vector<16x256xi32>
    %54 = arith.cmpi eq, %52, %53 : vector<16x256xi32>
    %55 = arith.extui %54 : vector<16x256xi1> to vector<16x256xi32>
    %56 = arith.sitofp %55 : vector<16x256xi32> to vector<16x256xf32>
    %cst_12 = arith.constant 1.000000e+00 : f32
    %57 = vector.broadcast %cst_12 : f32 to vector<1x256xf32>
    %58 = arith.subf %57, %26 : vector<1x256xf32>
    %59 = vector.broadcast %58 : vector<1x256xf32> to vector<16x256xf32>
    %60 = arith.mulf %56, %59 : vector<16x256xf32>
    %61 = vector.broadcast %32 : vector<1x256xi32> to vector<16x256xi32>
    %62 = arith.cmpi eq, %52, %61 : vector<16x256xi32>
    %63 = arith.extui %62 : vector<16x256xi1> to vector<16x256xi32>
    %64 = arith.sitofp %63 : vector<16x256xi32> to vector<16x256xf32>
    %65 = vector.broadcast %26 : vector<1x256xf32> to vector<16x256xf32>
    %66 = arith.mulf %64, %65 : vector<16x256xf32>
    %67 = arith.addf %60, %66 : vector<16x256xf32>
    %c0_13 = arith.constant 0 : index
    %c0_14 = arith.constant 0 : index
    %c0_15 = arith.constant 0 : index
    %c0_16 = arith.constant 0 : index
    %68 = vector.load %arg4[%c0_13, %c0_14, %c0_15, %c0_16] : memref<1x8x16x16xf32, #tpu.memory_space<vmem>>, vector<1x8x16x16xf32>
    %69 = vector.shape_cast %68 : vector<1x8x16x16xf32> to vector<8x16x16xf32>
    %70 = vector.shape_cast %69 : vector<8x16x16xf32> to vector<128x16xf32>
    %cst_17 = arith.constant dense<0.000000e+00> : vector<128x256xf32>
    %71 = tpu.matmul %70, %48, %cst_17 {dimension_numbers = #tpu.dot_dimension_numbers<[1], [0], [0], [1], [0, 0, 1, 1], [], []>} : vector<128x16xf32>, vector<16x256xf32>, vector<128x256xf32> -> vector<128x256xf32>
    %72 = vector.shape_cast %71 : vector<128x256xf32> to vector<8x16x256xf32>
    %73 = vector.shape_cast %67 : vector<16x256xf32> to vector<1x16x256xf32>
    %74 = vector.broadcast %73 : vector<1x16x256xf32> to vector<8x16x256xf32>
    %75 = arith.mulf %72, %74 : vector<8x16x256xf32>
    %cst_18 = arith.constant dense<0.000000e+00> : vector<8x256xf32>
    %76 = vector.multi_reduction <add>, %75, %cst_18 [1] : vector<8x16x256xf32> to vector<8x256xf32>
    %c0_19 = arith.constant 0 : index
    %c0_20 = arith.constant 0 : index
    %77 = vector.load %arg6[%c0_19, %c0_20] : memref<8x256xf32, #tpu.memory_space<vmem>>, vector<8x256xf32>
    %78 = arith.addf %77, %76 : vector<8x256xf32>
    %c0_21 = arith.constant 0 : index
    %c0_22 = arith.constant 0 : index
    %79 = vector.load %arg6[%c0_21, %c0_22] : memref<8x256xf32, #tpu.memory_space<vmem>>, vector<8x256xf32>
    tpu.vector_store %arg6[%c0_21, %c0_22], %78 {strides = array<i32>} : memref<8x256xf32, #tpu.memory_space<vmem>>, vector<8x256xf32>,
    %c0_i32_23 = arith.constant 0 : i32
    %80 = arith.cmpi eq, %arg2, %c0_i32_23 : i32
    %81 = arith.extui %80 : i1 to i32
    %c0_i32_24 = arith.constant 0 : i32
    %82 = arith.cmpi ne, %81, %c0_i32_24 : i32
    scf.if %82 {
      %c0_25 = arith.constant 0 : index
      %c0_26 = arith.constant 0 : index
      %83 = vector.load %arg6[%c0_25, %c0_26] : memref<8x256xf32, #tpu.memory_space<vmem>>, vector<8x256xf32>
      %c0_27 = arith.constant 0 : index
      %c0_28 = arith.constant 0 : index
      %c0_29 = arith.constant 0 : index
      %84 = vector.load %arg5[%c0_27, %c0_28, %c0_29] : memref<1x8x256xf32, #tpu.memory_space<vmem>>, vector<1x8x256xf32>
      %85 = vector.shape_cast %84 : vector<1x8x256xf32> to vector<8x256xf32>
      %86 = vector.shape_cast %83 : vector<8x256xf32> to vector<1x8x256xf32>
      tpu.vector_store %arg5[%c0_27, %c0_28, %c0_29], %86 {strides = array<i32>} : memref<1x8x256xf32, #tpu.memory_space<vmem>>, vector<1x8x256xf32>,
    } else {
    }
    return
  }
  func.func @transform_0(%arg0: i32, %arg1: i32, %arg2: i32) -> (i32, i32, i32) {
    %c0_i32 = arith.constant 0 : i32
    %c0_i32_0 = arith.constant 0 : i32
    return %arg0, %c0_i32, %arg1 : i32, i32, i32
  }
  func.func @transform_1(%arg0: i32, %arg1: i32, %arg2: i32) -> (i32, i32, i32, i32) {
    %c0_i32 = arith.constant 0 : i32
    %c0_i32_0 = arith.constant 0 : i32
    %c0_i32_1 = arith.constant 0 : i32
    return %arg0, %c0_i32, %arg2, %c0_i32_0 : i32, i32, i32, i32
  }
  func.func @transform_2(%arg0: i32, %arg1: i32, %arg2: i32) -> (i32, i32, i32) {
    %c0_i32 = arith.constant 0 : i32
    %c0_i32_0 = arith.constant 0 : i32
    return %arg0, %c0_i32, %arg1 : i32, i32, i32
  }
}

</mosaic_0001>

<llo_original>
// kernel: tpu_custom_call.1
$region0: #{tpu_custom_call.1}
  #allocation0 [shape = 'u32[]', space=smem, size = 0x4, offset = 0x4, fixed_abs, tag = 'smem constant byte address 0x4 - core index']
  #allocation1 [shape = 'u32[144,128]{1,0:T(1,128)}', space=vmem, size = 0x12000, scoped, tag = 'internal scratch']
  #allocation2 [shape = 'f32[8,256]{1,0:T(8,128)}', space=vmem, size = 0x2000, scoped, tag = 'scratch operand']
  %s0 = inlined_call_operand.hbm [shape: f32[2,2,256], index: 0, kind: input, shape index: {}]
  %s1 = inlined_call_operand.hbm [shape: f32[2,8,16,16], index: 1, kind: input, shape index: {}]
  %s2 = inlined_call_operand.hbm [shape: f32[2,8,256], index: 2, kind: output, shape index: {}]
  %s3 = sld [smem:[#allocation0]]
  $region57: #{tpu_custom_call.1} parent=0
    _
  %s5 = ssub.s32 1, %s3
  %s6 = scalar_select 0, %s5, %s3
  $region1: #{tpu_custom_call.1} parent=0
    #allocation3 [shape = 'u8[4096]{0}', space=vmem, size = 0x1000, scoped, tag = 'input window, operand 0']
    #allocation4 [shape = 's32[2]{0}', space=sflag, size = 0x8, scoped, tag = 'scoped memory for tpu_custom_call.1']
    #allocation5 [shape = 's32[2]{0}', space=sflag, size = 0x8, scoped, tag = 'scoped memory for tpu_custom_call.1']
    #allocation6 [shape = 'u8[131072]{0}', space=vmem, size = 0x20000, scoped, tag = 'input window, operand 1']
    #allocation7 [shape = 's32[2]{0}', space=sflag, size = 0x8, scoped, tag = 'scoped memory for tpu_custom_call.1']
    #allocation8 [shape = 'u8[16384]{0}', space=vmem, size = 0x4000, scoped, tag = 'output window, operand 0']
    %7 = vsyncpa [#allocation4], 0
    %s8 = scalar_lea.sflag [#allocation4], 1
    %9 = vsyncpa %s8, 0
    %10 = vsyncpa [#allocation7], 0
    %s11 = scalar_lea.sflag [#allocation7], 1
    %12 = vsyncpa %s11, 0
    %13 = vsyncpa [#allocation5], 0
    %s14 = scalar_lea.sflag [#allocation5], 1
    %15 = vsyncpa %s14, 0
    loop: start=0, step=1, limit=4
    $region2: #{tpu_custom_call.1} parent=1 // loop_pre_header
      _
    $region3: #{tpu_custom_call.1} parent=1 // loop_header
      %s17 = sphi 0, %s21
      %p18 = scmp.ge.s32.totalorder %s17, 4
      %s24 = sphi 0, %s43
      %s25 = sphi 0, %s39
      %s26 = sphi 0, %s35
      %s27 = sphi 0, %s24
      %s28 = sphi 0, %s25
      %s29 = sphi 0, %s26
      %s30 = sphi 0, %s27
      %s31 = sphi 0, %s28
      %s32 = sphi 0, %s29
      %s48 = sphi 0, %s50
      %s51 = sphi 0, %s48
      %s52 = sphi 0, %s51
      %s68 = sphi 0, %s52
      %s76 = sphi 0, %s78
      %s79 = sphi 0, %s76
      %s80 = sphi 0, %s79
      %s96 = sphi 0, %s80
      %s104 = sphi 0, %s106
      %s107 = sphi 0, %s104
      %s108 = sphi 0, %s107
      %s124 = sphi 0, %s108
    $region4: #{tpu_custom_call.1} parent=1 // loop_header_branch
      %20 = sbr.rel (%p18) target = $region8
    $region5: #{tpu_custom_call.1} parent=1 // loop_body
      %s22 = ssub.s32 %s17, 1
      %s23 = ssub.s32 %s17, 2
      %s33 = sadd.s32 1, %s26
      %p34 = scmp.ge.s32.totalorder %s33, 1
      %s35 = scalar_select %p34, 0, %s33
      %s36 = sadd.s32 1, %s25
      %s37 = scalar_select %p34, %s36, %s25
      %p38 = scmp.ge.s32.totalorder %s37, 1
      %s39 = scalar_select %p38, 0, %s37
      %s40 = sadd.s32 1, %s24
      %s41 = scalar_select %p38, %s40, %s24
      %p42 = scmp.ge.s32.totalorder %s41, 2
      %s43 = scalar_select %p42, 0, %s41
      %s44 = ssub.s32 %s24, %s43
      %s45 = ssub.s32 %s25, %s39
      %s46 = sor.u32 %s44, %s45
      %p47 = scmp.eq.s32.totalorder %s46, 0
      %s49 = sadd.s32 %s48, 1
      %s50 = scalar_select %p47, %s48, %s49
      %p53 = pneg %p47
      %p54 = scmp.eq.s32.totalorder %s17, 1
      %p55 = por %p53, %p54
      %p56 = scmp.ne.s32.totalorder %s48, %s51
      %p57 = scmp.eq.s32.totalorder %s17, 0
      %p58 = por %p56, %p57
      %p59 = scmp.ne.s32.totalorder %s48, %s51
      %p60 = scmp.eq.s32.totalorder %s22, 1
      %p61 = por %p59, %p60
      %p62 = scmp.ne.s32.totalorder %s51, %s52
      %p63 = scmp.eq.s32.totalorder %s22, 0
      %p64 = por %p62, %p63
      %p65 = scmp.ne.s32.totalorder %s51, %s52
      %p66 = scmp.eq.s32.totalorder %s23, 1
      %p67 = por %p65, %p66
      %p69 = scmp.ne.s32.totalorder %s52, %s68
      %p70 = scmp.eq.s32.totalorder %s23, 0
      %p71 = por %p69, %p70
      %s72 = ssub.s32 %s24, %s43
      %s73 = ssub.s32 %s26, %s35
      %s74 = sor.u32 %s72, %s73
      %p75 = scmp.eq.s32.totalorder %s74, 0
      %s77 = sadd.s32 %s76, 1
      %s78 = scalar_select %p75, %s76, %s77
      %p81 = pneg %p75
      %p82 = scmp.eq.s32.totalorder %s17, 1
      %p83 = por %p81, %p82
      %p84 = scmp.ne.s32.totalorder %s76, %s79
      %p85 = scmp.eq.s32.totalorder %s17, 0
      %p86 = por %p84, %p85
      %p87 = scmp.ne.s32.totalorder %s76, %s79
      %p88 = scmp.eq.s32.totalorder %s22, 1
      %p89 = por %p87, %p88
      %p90 = scmp.ne.s32.totalorder %s79, %s80
      %p91 = scmp.eq.s32.totalorder %s22, 0
      %p92 = por %p90, %p91
      %p93 = scmp.ne.s32.totalorder %s79, %s80
      %p94 = scmp.eq.s32.totalorder %s23, 1
      %p95 = por %p93, %p94
      %p97 = scmp.ne.s32.totalorder %s80, %s96
      %p98 = scmp.eq.s32.totalorder %s23, 0
      %p99 = por %p97, %p98
      %s100 = ssub.s32 %s24, %s43
      %s101 = ssub.s32 %s25, %s39
      %s102 = sor.u32 %s100, %s101
      %p103 = scmp.eq.s32.totalorder %s102, 0
      %s105 = sadd.s32 %s104, 1
      %s106 = scalar_select %p103, %s104, %s105
      %p109 = pneg %p103
      %p110 = scmp.eq.s32.totalorder %s17, 1
      %p111 = por %p109, %p110
      %p112 = scmp.ne.s32.totalorder %s104, %s107
      %p113 = scmp.eq.s32.totalorder %s17, 0
      %p114 = por %p112, %p113
      %p115 = scmp.ne.s32.totalorder %s104, %s107
      %p116 = scmp.eq.s32.totalorder %s22, 1
      %p117 = por %p115, %p116
      %p118 = scmp.ne.s32.totalorder %s107, %s108
      %p119 = scmp.eq.s32.totalorder %s22, 0
      %p120 = por %p118, %p119
      %p121 = scmp.ne.s32.totalorder %s107, %s108
      %p122 = scmp.eq.s32.totalorder %s23, 1
      %p123 = por %p121, %p122
      %p125 = scmp.ne.s32.totalorder %s108, %s124
      %p126 = scmp.eq.s32.totalorder %s23, 0
      %p127 = por %p125, %p126
      %p128 = scmp.le.s32.totalorder 1, %s17
      %p129 = scmp.lt.s32.totalorder %s17, 3
      %p130 = pnand %p128, %p129
      %p131 = pneg %p130
      // Predicated region
      $region9: #{tpu_custom_call.1} parent=5 // pred_check
        _
      $region10: #{tpu_custom_call.1} parent=5 // pred_check_branch
        %133 = sbr.rel (%p130) target = $region12
      $region11: #{tpu_custom_call.1} parent=5 // pred_region
        %s134 = ssub.s32 %s17, 1
      $region12: #{tpu_custom_call.1} parent=5 // pred_fallthru
        _
      %p135 = scmp.lt.s32.totalorder %s17, 2
      // Predicated region
      $region13: #{tpu_custom_call.1} parent=5 // pred_check
        %p136 = pneg %p135
      $region14: #{tpu_custom_call.1} parent=5 // pred_check_branch
        %138 = sbr.rel (%p136) target = $region16
      $region15: #{tpu_custom_call.1} parent=5 // pred_region
        // Predicated region
        $region17: #{tpu_custom_call.1} parent=15 // pred_check
          %p139 = pneg %p58
        $region18: #{tpu_custom_call.1} parent=15 // pred_check_branch
          %141 = sbr.rel (%p139) target = $region20
        $region19: #{tpu_custom_call.1} parent=15 // pred_region
          %s142 = sand.u32 %s48, 1
          %s143 = scalar_lea.sflag [#allocation4], %s142
          %s144 = sand.u32 %s48, 1
          %s145 = smul.addr %s144, 4
          %s146 = scalar_lea.vmem [#allocation3], %s145
          %s147 = smul.u32 2, %s25
          %s149 = ssub.s32 64, 64
          %150 = vsyncadd %s143, %s149
          %s151 = smul.addr %s24, 2
          %s152 = sadd.s32 %s147, %s151
          %s153 = smul.addr %s152, 32
          %s154 = scalar_lea.hbm %s0, %s153
          %s156 = sshll.u32 %s146, 4
          %s157 = int_to_ptr.vmem [resolvable:$true] %s156
          %159 = dma.hbm_to_vmem [thread:$0]  %s154, 64, %s157, %s143
        $region20: #{tpu_custom_call.1} parent=15 // pred_fallthru
          _
        // Predicated region
        $region21: #{tpu_custom_call.1} parent=15 // pred_check
          %p160 = pneg %p86
        $region22: #{tpu_custom_call.1} parent=15 // pred_check_branch
          %162 = sbr.rel (%p160) target = $region24
        $region23: #{tpu_custom_call.1} parent=15 // pred_region
          %s163 = sand.u32 %s76, 1
          %s164 = scalar_lea.sflag [#allocation7], %s163
          %s165 = sand.u32 %s76, 1
          %s166 = smul.addr %s165, 128
          %s167 = scalar_lea.vmem [#allocation6], %s166
          %s168 = smul.u32 2, %s26
          %s170 = ssub.s32 2048, 2048
          %171 = vsyncadd %s164, %s170
          %s172 = smul.addr %s24, 16
          %s173 = sadd.s32 %s168, %s172
          %s174 = smul.addr %s173, 128
          %s175 = scalar_lea.hbm %s1, %s174
          %s176 = sshll.u32 %s167, 4
          %s177 = int_to_ptr.vmem [resolvable:$true] %s176
          %182 = dma.hbm_to_vmem [thread:$0]  %s175, 2048, %s177, %s164, 128, 128, 8
        $region24: #{tpu_custom_call.1} parent=15 // pred_fallthru
          _
      $region16: #{tpu_custom_call.1} parent=5 // pred_fallthru
        _
      %p183 = scmp.le.s32.totalorder 1, %s17
      %p184 = scmp.lt.s32.totalorder %s17, 3
      %p185 = pnand %p183, %p184
      %p186 = pneg %p185
      // Predicated region
      $region25: #{tpu_custom_call.1} parent=5 // pred_check
        _
      $region26: #{tpu_custom_call.1} parent=5 // pred_check_branch
        %188 = sbr.rel (%p185) target = $region28
      $region27: #{tpu_custom_call.1} parent=5 // pred_region
        %s189 = ssub.s32 %s17, 1
        %s190 = sand.u32 %s51, 1
        %s191 = scalar_lea.sflag [#allocation4], %s190
        %s192 = sand.u32 %s51, 1
        %s193 = smul.addr %s192, 4
        %s194 = scalar_lea.vmem [#allocation3], %s193
        // Predicated region
        $region29: #{tpu_custom_call.1} parent=27 // pred_check
          %p195 = pneg %p64
        $region30: #{tpu_custom_call.1} parent=27 // pred_check_branch
          %197 = sbr.rel (%p195) target = $region32
        $region31: #{tpu_custom_call.1} parent=27 // pred_region
          %198 = dma.done %s191, 64
        $region32: #{tpu_custom_call.1} parent=27 // pred_fallthru
          _
        %s199 = sand.u32 %s79, 1
        %s200 = scalar_lea.sflag [#allocation7], %s199
        %s201 = sand.u32 %s79, 1
        %s202 = smul.addr %s201, 128
        %s203 = scalar_lea.vmem [#allocation6], %s202
        // Predicated region
        $region33: #{tpu_custom_call.1} parent=27 // pred_check
          %p204 = pneg %p92
        $region34: #{tpu_custom_call.1} parent=27 // pred_check_branch
          %206 = sbr.rel (%p204) target = $region36
        $region35: #{tpu_custom_call.1} parent=27 // pred_region
          %207 = dma.done %s200, 2048
        $region36: #{tpu_custom_call.1} parent=27 // pred_fallthru
          _
        %s208 = sand.u32 %s51, 1
        %s209 = scalar_lea.sflag [#allocation4], %s208
        %s210 = sand.u32 %s51, 1
        %s211 = smul.addr %s210, 4
        %s212 = scalar_lea.vmem [#allocation3], %s211
        %p213 = pneg %p64
        %p214 = pneg %p61
        %s215 = sand.u32 %s79, 1
        %s216 = scalar_lea.sflag [#allocation7], %s215
        %s217 = sand.u32 %s79, 1
        %s218 = smul.addr %s217, 128
        %s219 = scalar_lea.vmem [#allocation6], %s218
        %p220 = pneg %p92
        %p221 = pneg %p89
        %p222 = pneg %p120
        %p223 = pneg %p117
        %s224 = sand.u32 %s107, 1
        %s225 = scalar_lea.sflag [#allocation5], %s224
        %s226 = sand.u32 %s107, 1
        %s227 = smul.addr %s226, 16
        %s228 = scalar_lea.vmem [#allocation8], %s227
        %s229 = smul.u32 2, %s28
        %s230 = smul.u32 2, %s29
        %s231 = smul.u32 2, %s28
        %p232 = scmp.eq.s32.totalorder %s29, 0
        // Predicated region
        $region37: #{tpu_custom_call.1} parent=27 // pred_check
          %p233 = pneg %p232
        $region38: #{tpu_custom_call.1} parent=27 // pred_check_branch
          %235 = sbr.rel (%p233) target = $region40
        $region39: #{tpu_custom_call.1} parent=27 // pred_region
          %236 = vst [vmem:[#allocation2] sm:$0xff] 0.0
          %237 = vst [vmem:[#allocation2 + $0x8] sm:$0xff] 0.0
        $region40: #{tpu_custom_call.1} parent=27 // pred_fallthru
          _
        %v238 = vld [vmem:[%s194] sm:$0xf]
        %v239 = vadd.f32 %v238, 1.0
        %v240 = vmul.f32 %v239, 16.0
        %v241 = vsub.f32 %v240, 1.0
        %v242 = vmul.f32 %v241, 0.5
        %v243 = vfloor.f32 %v242
        %v244 = vsub.f32 %v242, %v243
        %v245 = vcvt.f32.s32.to.zero.pseudo %v243
        %v246 = vadd.s32 %v245, 1
        %v247 = vlaneseq
        %v248 = vshrl.u32 %v247, 7
        %v249 = vadd.s32 %v248, 8
        %v250 = vlaneseq
        %v251 = vshrl.u32 %v250, 7
        %v252 = vsub.s32 0, %v251
        %v253 = vrot.slane %v245, %v252
        %v254 = vlaneseq
        %v255 = vshrl.u32 %v254, 7
        %v256 = vsub.s32 2, %v255
        %v257 = vrot.slane %v245, %v256
        %v258 = vlaneseq
        %v259 = vshrl.u32 %v258, 7
        %v260 = vsub.s32 0, %v259
        %v261 = vrot.slane %v253, %v260
        %v262 = vlaneseq
        %v263 = vshrl.u32 %v262, 7
        %v264 = vsub.s32 0, %v263
        %v265 = vrot.slane %v257, %v264
        %vm266 = vcmp.eq.s32.totalorder %v248, %v261
        %vm267 = vcmp.eq.s32.totalorder %v248, %v265
        %vm268 = vcmp.eq.s32.totalorder %v249, %v261
        %vm269 = vcmp.eq.s32.totalorder %v249, %v265
        %v270 = vsel %vm266, 1, 0
        %v271 = vsel %vm267, 1, 0
        %v272 = vsel %vm268, 1, 0
        %v273 = vsel %vm269, 1, 0
        %v274 = vcvt.s32.f32 %v270
        %v275 = vcvt.s32.f32 %v271
        %v276 = vcvt.s32.f32 %v272
        %v277 = vcvt.s32.f32 %v273
        %v278 = vsub.f32 1.0, %v244
        %v280 = vlaneseq
        %v281 = vshrl.u32 %v280, 7
        %v282 = vsub.s32 0, %v281
        %v283 = vrot.slane %v278, %v282
        %v284 = vlaneseq
        %v285 = vshrl.u32 %v284, 7
        %v286 = vsub.s32 2, %v285
        %v287 = vrot.slane %v278, %v286
        %v290 = vlaneseq
        %v291 = vshrl.u32 %v290, 7
        %v292 = vsub.s32 0, %v291
        %v293 = vrot.slane %v283, %v292
        %v294 = vlaneseq
        %v295 = vshrl.u32 %v294, 7
        %v296 = vsub.s32 0, %v295
        %v297 = vrot.slane %v287, %v296
        %v298 = vmul.f32 %v274, %v293
        %v299 = vmul.f32 %v275, %v297
        %v300 = vmul.f32 %v276, %v293
        %v301 = vmul.f32 %v277, %v297
        %v302 = vlaneseq
        %v303 = vshrl.u32 %v302, 7
        %v304 = vsub.s32 0, %v303
        %v305 = vrot.slane %v246, %v304
        %v306 = vlaneseq
        %v307 = vshrl.u32 %v306, 7
        %v308 = vsub.s32 2, %v307
        %v309 = vrot.slane %v246, %v308
        %v310 = vlaneseq
        %v311 = vshrl.u32 %v310, 7
        %v312 = vsub.s32 0, %v311
        %v313 = vrot.slane %v305, %v312
        %v314 = vlaneseq
        %v315 = vshrl.u32 %v314, 7
        %v316 = vsub.s32 0, %v315
        %v317 = vrot.slane %v309, %v316
        %vm318 = vcmp.eq.s32.totalorder %v248, %v313
        %vm319 = vcmp.eq.s32.totalorder %v248, %v317
        %vm320 = vcmp.eq.s32.totalorder %v249, %v313
        %vm321 = vcmp.eq.s32.totalorder %v249, %v317
        %v322 = vsel %vm318, 1, 0
        %v323 = vsel %vm319, 1, 0
        %v324 = vsel %vm320, 1, 0
        %v325 = vsel %vm321, 1, 0
        %v326 = vcvt.s32.f32 %v322
        %v327 = vcvt.s32.f32 %v323
        %v328 = vcvt.s32.f32 %v324
        %v329 = vcvt.s32.f32 %v325
        %v331 = vlaneseq
        %v332 = vshrl.u32 %v331, 7
        %v333 = vsub.s32 0, %v332
        %v334 = vrot.slane %v244, %v333
        %v335 = vlaneseq
        %v336 = vshrl.u32 %v335, 7
        %v337 = vsub.s32 2, %v336
        %v338 = vrot.slane %v244, %v337
        %v341 = vlaneseq
        %v342 = vshrl.u32 %v341, 7
        %v343 = vsub.s32 0, %v342
        %v344 = vrot.slane %v334, %v343
        %v345 = vlaneseq
        %v346 = vshrl.u32 %v345, 7
        %v347 = vsub.s32 0, %v346
        %v348 = vrot.slane %v338, %v347
        %v349 = vmul.f32 %v326, %v344
        %v350 = vmul.f32 %v327, %v348
        %v351 = vmul.f32 %v328, %v344
        %v352 = vmul.f32 %v329, %v348
        %v353 = vadd.f32 %v298, %v349
        %v354 = vadd.f32 %v299, %v350
        %v355 = vadd.f32 %v300, %v351
        %v356 = vadd.f32 %v301, %v352
        %s357 = smul.u32 %s29, 16
        %v358 = vstv %s357
        %v359 = vadd.s32 %v358, %v248
        %v360 = vadd.s32 %v358, %v249
        %v361 = vlaneseq
        %v362 = vshrl.u32 %v361, 7
        %v363 = vsub.s32 1, %v362
        %v364 = vrot.slane %v245, %v363
        %v365 = vlaneseq
        %v366 = vshrl.u32 %v365, 7
        %v367 = vsub.s32 3, %v366
        %v368 = vrot.slane %v245, %v367
        %v369 = vlaneseq
        %v370 = vshrl.u32 %v369, 7
        %v371 = vsub.s32 1, %v370
        %v372 = vrot.slane %v364, %v371
        %v373 = vlaneseq
        %v374 = vshrl.u32 %v373, 7
        %v375 = vsub.s32 1, %v374
        %v376 = vrot.slane %v368, %v375
        %vm377 = vcmp.eq.s32.totalorder %v359, %v372
        %vm378 = vcmp.eq.s32.totalorder %v359, %v376
        %vm379 = vcmp.eq.s32.totalorder %v360, %v372
        %vm380 = vcmp.eq.s32.totalorder %v360, %v376
        %v381 = vsel %vm377, 1, 0
        %v382 = vsel %vm378, 1, 0
        %v383 = vsel %vm379, 1, 0
        %v384 = vsel %vm380, 1, 0
        %v385 = vcvt.s32.f32 %v381
        %v386 = vcvt.s32.f32 %v382
        %v387 = vcvt.s32.f32 %v383
        %v388 = vcvt.s32.f32 %v384
        %v389 = vlaneseq
        %v390 = vshrl.u32 %v389, 7
        %v391 = vsub.s32 1, %v390
        %v392 = vrot.slane %v278, %v391
        %v393 = vlaneseq
        %v394 = vshrl.u32 %v393, 7
        %v395 = vsub.s32 3, %v394
        %v396 = vrot.slane %v278, %v395
        %v399 = vlaneseq
        %v400 = vshrl.u32 %v399, 7
        %v401 = vsub.s32 1, %v400
        %v402 = vrot.slane %v392, %v401
        %v403 = vlaneseq
        %v404 = vshrl.u32 %v403, 7
        %v405 = vsub.s32 1, %v404
        %v406 = vrot.slane %v396, %v405
        %v407 = vmul.f32 %v385, %v402
        %v408 = vmul.f32 %v386, %v406
        %v409 = vmul.f32 %v387, %v402
        %v410 = vmul.f32 %v388, %v406
        %v411 = vlaneseq
        %v412 = vshrl.u32 %v411, 7
        %v413 = vsub.s32 1, %v412
        %v414 = vrot.slane %v246, %v413
        %v415 = vlaneseq
        %v416 = vshrl.u32 %v415, 7
        %v417 = vsub.s32 3, %v416
        %v418 = vrot.slane %v246, %v417
        %v419 = vlaneseq
        %v420 = vshrl.u32 %v419, 7
        %v421 = vsub.s32 1, %v420
        %v422 = vrot.slane %v414, %v421
        %v423 = vlaneseq
        %v424 = vshrl.u32 %v423, 7
        %v425 = vsub.s32 1, %v424
        %v426 = vrot.slane %v418, %v425
        %vm427 = vcmp.eq.s32.totalorder %v359, %v422
        %vm428 = vcmp.eq.s32.totalorder %v359, %v426
        %vm429 = vcmp.eq.s32.totalorder %v360, %v422
        %vm430 = vcmp.eq.s32.totalorder %v360, %v426
        %v431 = vsel %vm427, 1, 0
        %v432 = vsel %vm428, 1, 0
        %v433 = vsel %vm429, 1, 0
        %v434 = vsel %vm430, 1, 0
        %v435 = vcvt.s32.f32 %v431
        %v436 = vcvt.s32.f32 %v432
        %v437 = vcvt.s32.f32 %v433
        %v438 = vcvt.s32.f32 %v434
        %v439 = vlaneseq
        %v440 = vshrl.u32 %v439, 7
        %v441 = vsub.s32 1, %v440
        %v442 = vrot.slane %v244, %v441
        %v443 = vlaneseq
        %v444 = vshrl.u32 %v443, 7
        %v445 = vsub.s32 3, %v444
        %v446 = vrot.slane %v244, %v445
        %v449 = vlaneseq
        %v450 = vshrl.u32 %v449, 7
        %v451 = vsub.s32 1, %v450
        %v452 = vrot.slane %v442, %v451
        %v453 = vlaneseq
        %v454 = vshrl.u32 %v453, 7
        %v455 = vsub.s32 1, %v454
        %v456 = vrot.slane %v446, %v455
        %v457 = vmul.f32 %v435, %v452
        %v458 = vmul.f32 %v436, %v456
        %v459 = vmul.f32 %v437, %v452
        %v460 = vmul.f32 %v438, %v456
        %v461 = vadd.f32 %v407, %v457
        %v462 = vadd.f32 %v408, %v458
        %v463 = vadd.f32 %v409, %v459
        %v464 = vadd.f32 %v410, %v460
        %v465 = vld [vmem:[%s203] sm:$0xff]
        %v466 = vld [vmem:[%s203 + $0x8] sm:$0xff]
        %v467 = vld [vmem:[%s203 + $0x10] sm:$0xff]
        %v468 = vld [vmem:[%s203 + $0x18] sm:$0xff]
        %v469 = vld [vmem:[%s203 + $0x20] sm:$0xff]
        %v470 = vld [vmem:[%s203 + $0x28] sm:$0xff]
        %v471 = vld [vmem:[%s203 + $0x30] sm:$0xff]
        %v472 = vld [vmem:[%s203 + $0x38] sm:$0xff]
        %v473 = vld [vmem:[%s203 + $0x40] sm:$0xff]
        %v474 = vld [vmem:[%s203 + $0x48] sm:$0xff]
        %v475 = vld [vmem:[%s203 + $0x50] sm:$0xff]
        %v476 = vld [vmem:[%s203 + $0x58] sm:$0xff]
        %v477 = vld [vmem:[%s203 + $0x60] sm:$0xff]
        %v478 = vld [vmem:[%s203 + $0x68] sm:$0xff]
        %v479 = vld [vmem:[%s203 + $0x70] sm:$0xff]
        %v480 = vld [vmem:[%s203 + $0x78] sm:$0xff]
        %vm481 = vcmask 130048
        %v483 = vsel %vm481, %v465, 0
        %v486 = vsel %vm481, %v466, 0
        %v489 = vsel %vm481, %v467, 0
        %v492 = vsel %vm481, %v468, 0
        %v495 = vsel %vm481, %v469, 0
        %v498 = vsel %vm481, %v470, 0
        %v501 = vsel %vm481, %v471, 0
        %v504 = vsel %vm481, %v472, 0
        %v507 = vsel %vm481, %v473, 0
        %v510 = vsel %vm481, %v474, 0
        %v513 = vsel %vm481, %v475, 0
        %v516 = vsel %vm481, %v476, 0
        %v519 = vsel %vm481, %v477, 0
        %v522 = vsel %vm481, %v478, 0
        %v525 = vsel %vm481, %v479, 0
        %v528 = vsel %vm481, %v480, 0
        %530 = vmatprep.subr.mxu0 0.0
        %531 = vmatpush1.msra.mxu0 0.0
        %532 = vmatprep.subr.mxu0 0.0
        %533 = vmatpush1.msra.mxu0 0.0
        %534 = vmatprep.subr.mxu0 0.0
        %535 = vmatpush1.msra.mxu0 0.0
        %536 = vmatprep.subr.mxu0 0.0
        %537 = vmatpush1.msra.mxu0 0.0
        %538 = vmatprep.subr.mxu0 0.0
        %539 = vmatpush1.msra.mxu0 0.0
        %540 = vmatprep.subr.mxu0 0.0
        %541 = vmatpush1.msra.mxu0 0.0
        %542 = vmatprep.subr.mxu0 0.0
        %543 = vmatpush1.msra.mxu0 0.0
        %544 = vmatprep.subr.mxu0 0.0
        %545 = vmatpush1.msra.mxu0 0.0
        %546 = vmatprep.subr.mxu0 0.0
        %547 = vmatpush1.msra.mxu0 0.0
        %548 = vmatprep.subr.mxu0 0.0
        %549 = vmatpush1.msra.mxu0 0.0
        %550 = vmatprep.subr.mxu0 0.0
        %551 = vmatpush1.msra.mxu0 0.0
        %552 = vmatprep.subr.mxu0 0.0
        %553 = vmatpush1.msra.mxu0 0.0
        %554 = vmatprep.subr.mxu0 0.0
        %555 = vmatpush1.msra.mxu0 0.0
        %556 = vmatprep.subr.mxu0 0.0
        %557 = vmatpush1.msra.mxu0 0.0
        %558 = vmatprep.subr.mxu0 %v356
        %559 = vmatpush1.msra.mxu0 %v355
        %560 = vmatprep.subr.mxu0 %v354
        %561 = vmatpush1.msra.mxu0 %v353
        %562 = vmatprep.subr.mxu0 0.0
        %563 = vmatpush2.msra.mxu0 0.0
        %564 = vmatprep.subr.mxu0 0.0
        %565 = vmatpush2.msra.mxu0 0.0
        %566 = vmatprep.subr.mxu0 0.0
        %567 = vmatpush2.msra.mxu0 0.0
        %568 = vmatprep.subr.mxu0 0.0
        %569 = vmatpush2.msra.mxu0 0.0
        %570 = vmatprep.subr.mxu0 0.0
        %571 = vmatpush2.msra.mxu0 0.0
        %572 = vmatprep.subr.mxu0 0.0
        %573 = vmatpush2.msra.mxu0 0.0
        %574 = vmatprep.subr.mxu0 0.0
        %575 = vmatpush2.msra.mxu0 0.0
        %576 = vmatprep.subr.mxu0 0.0
        %577 = vmatpush2.msra.mxu0 0.0
        %578 = vmatprep.subr.mxu0 0.0
        %579 = vmatpush2.msra.mxu0 0.0
        %580 = vmatprep.subr.mxu0 0.0
        %581 = vmatpush2.msra.mxu0 0.0
        %582 = vmatprep.subr.mxu0 0.0
        %583 = vmatpush2.msra.mxu0 0.0
        %584 = vmatprep.subr.mxu0 0.0
        %585 = vmatpush2.msra.mxu0 0.0
        %586 = vmatprep.subr.mxu0 0.0
        %587 = vmatpush2.msra.mxu0 0.0
        %588 = vmatprep.subr.mxu0 0.0
        %589 = vmatpush2.msra.mxu0 0.0
        %590 = vmatprep.subr.mxu0 0.0
        %591 = vmatpush2.msra.mxu0 0.0
        %592 = vmatprep.subr.mxu0 0.0
        %593 = vmatpush2.msra.mxu0 0.0
        %594 = vmatprep.mubr.f32.mxu0 0.0
        %595 = vmatmul.mubr.f32.gmra.mxu0 %v483
        %v596 = vpop.f32.mrf.mxu0
        %v597 = vadd.f32 0.0, %v596
        %v598 = vpop.f32.mrf.mxu0
        %v599 = vadd.f32 0.0, %v598
        %600 = vmatprep.mubr.f32.mxu0 0.0
        %601 = vmatmul.mubr.f32.gmra.mxu0 %v486
        %v602 = vpop.f32.mrf.mxu0
        %v603 = vadd.f32 0.0, %v602
        %v604 = vpop.f32.mrf.mxu0
        %v605 = vadd.f32 0.0, %v604
        %606 = vmatprep.mubr.f32.mxu0 0.0
        %607 = vmatmul.mubr.f32.gmra.mxu0 %v489
        %v608 = vpop.f32.mrf.mxu0
        %v609 = vadd.f32 0.0, %v608
        %v610 = vpop.f32.mrf.mxu0
        %v611 = vadd.f32 0.0, %v610
        %612 = vmatprep.mubr.f32.mxu0 0.0
        %613 = vmatmul.mubr.f32.gmra.mxu0 %v492
        %v614 = vpop.f32.mrf.mxu0
        %v615 = vadd.f32 0.0, %v614
        %v616 = vpop.f32.mrf.mxu0
        %v617 = vadd.f32 0.0, %v616
        %618 = vmatprep.mubr.f32.mxu0 0.0
        %619 = vmatmul.mubr.f32.gmra.mxu0 %v495
        %v620 = vpop.f32.mrf.mxu0
        %v621 = vadd.f32 0.0, %v620
        %v622 = vpop.f32.mrf.mxu0
        %v623 = vadd.f32 0.0, %v622
        %624 = vmatprep.mubr.f32.mxu0 0.0
        %625 = vmatmul.mubr.f32.gmra.mxu0 %v498
        %v626 = vpop.f32.mrf.mxu0
        %v627 = vadd.f32 0.0, %v626
        %v628 = vpop.f32.mrf.mxu0
        %v629 = vadd.f32 0.0, %v628
        %630 = vmatprep.mubr.f32.mxu0 0.0
        %631 = vmatmul.mubr.f32.gmra.mxu0 %v501
        %v632 = vpop.f32.mrf.mxu0
        %v633 = vadd.f32 0.0, %v632
        %v634 = vpop.f32.mrf.mxu0
        %v635 = vadd.f32 0.0, %v634
        %636 = vmatprep.mubr.f32.mxu0 0.0
        %637 = vmatmul.mubr.f32.gmra.mxu0 %v504
        %v638 = vpop.f32.mrf.mxu0
        %v639 = vadd.f32 0.0, %v638
        %v640 = vpop.f32.mrf.mxu0
        %v641 = vadd.f32 0.0, %v640
        %642 = vmatprep.mubr.f32.mxu0 0.0
        %643 = vmatmul.mubr.f32.gmra.mxu0 %v507
        %v644 = vpop.f32.mrf.mxu0
        %v645 = vadd.f32 0.0, %v644
        %v646 = vpop.f32.mrf.mxu0
        %v647 = vadd.f32 0.0, %v646
        %648 = vmatprep.mubr.f32.mxu0 0.0
        %649 = vmatmul.mubr.f32.gmra.mxu0 %v510
        %v650 = vpop.f32.mrf.mxu0
        %v651 = vadd.f32 0.0, %v650
        %v652 = vpop.f32.mrf.mxu0
        %v653 = vadd.f32 0.0, %v652
        %654 = vmatprep.mubr.f32.mxu0 0.0
        %655 = vmatmul.mubr.f32.gmra.mxu0 %v513
        %v656 = vpop.f32.mrf.mxu0
        %v657 = vadd.f32 0.0, %v656
        %v658 = vpop.f32.mrf.mxu0
        %v659 = vadd.f32 0.0, %v658
        %660 = vmatprep.mubr.f32.mxu0 0.0
        %661 = vmatmul.mubr.f32.gmra.mxu0 %v516
        %v662 = vpop.f32.mrf.mxu0
        %v663 = vadd.f32 0.0, %v662
        %v664 = vpop.f32.mrf.mxu0
        %v665 = vadd.f32 0.0, %v664
        %666 = vmatprep.mubr.f32.mxu0 0.0
        %667 = vmatmul.mubr.f32.gmra.mxu0 %v519
        %v668 = vpop.f32.mrf.mxu0
        %v669 = vadd.f32 0.0, %v668
        %v670 = vpop.f32.mrf.mxu0
        %v671 = vadd.f32 0.0, %v670
        %672 = vmatprep.mubr.f32.mxu0 0.0
        %673 = vmatmul.mubr.f32.gmra.mxu0 %v522
        %v674 = vpop.f32.mrf.mxu0
        %v675 = vadd.f32 0.0, %v674
        %v676 = vpop.f32.mrf.mxu0
        %v677 = vadd.f32 0.0, %v676
        %678 = vmatprep.mubr.f32.mxu0 0.0
        %679 = vmatmul.mubr.f32.gmra.mxu0 %v525
        %v680 = vpop.f32.mrf.mxu0
        %v681 = vadd.f32 0.0, %v680
        %v682 = vpop.f32.mrf.mxu0
        %v683 = vadd.f32 0.0, %v682
        %684 = vmatprep.mubr.f32.mxu0 0.0
        %685 = vmatmul.mubr.f32.gmra.mxu0 %v528
        %v686 = vpop.f32.mrf.mxu0
        %v687 = vadd.f32 0.0, %v686
        %v688 = vpop.f32.mrf.mxu0
        %v689 = vadd.f32 0.0, %v688
        %690 = vdwg.mxu0
        %v691 = vmul.f32 %v597, %v461
        %v692 = vmul.f32 %v599, %v462
        %v693 = vmul.f32 %v603, %v463
        %v694 = vmul.f32 %v605, %v464
        %v695 = vmul.f32 %v609, %v461
        %v696 = vmul.f32 %v611, %v462
        %v697 = vmul.f32 %v615, %v463
        %v698 = vmul.f32 %v617, %v464
        %v699 = vmul.f32 %v621, %v461
        %v700 = vmul.f32 %v623, %v462
        %v701 = vmul.f32 %v627, %v463
        %v702 = vmul.f32 %v629, %v464
        %v703 = vmul.f32 %v633, %v461
        %v704 = vmul.f32 %v635, %v462
        %v705 = vmul.f32 %v639, %v463
        %v706 = vmul.f32 %v641, %v464
        %v707 = vmul.f32 %v645, %v461
        %v708 = vmul.f32 %v647, %v462
        %v709 = vmul.f32 %v651, %v463
        %v710 = vmul.f32 %v653, %v464
        %v711 = vmul.f32 %v657, %v461
        %v712 = vmul.f32 %v659, %v462
        %v713 = vmul.f32 %v663, %v463
        %v714 = vmul.f32 %v665, %v464
        %v715 = vmul.f32 %v669, %v461
        %v716 = vmul.f32 %v671, %v462
        %v717 = vmul.f32 %v675, %v463
        %v718 = vmul.f32 %v677, %v464
        %v719 = vmul.f32 %v681, %v461
        %v720 = vmul.f32 %v683, %v462
        %v721 = vmul.f32 %v687, %v463
        %v722 = vmul.f32 %v689, %v464
        %v723 = vadd.f32 %v691, %v693
        %v724 = vrot.slane %v723, 4
        %v725 = vadd.f32 %v723, %v724
        %v726 = vrot.slane %v725, 2
        %v727 = vadd.f32 %v725, %v726
        %v728 = vrot.slane %v727, 1
        %v729 = vadd.f32 %v727, %v728
        %v730 = vadd.f32 %v692, %v694
        %v731 = vrot.slane %v730, 4
        %v732 = vadd.f32 %v730, %v731
        %v733 = vrot.slane %v732, 2
        %v734 = vadd.f32 %v732, %v733
        %v735 = vrot.slane %v734, 1
        %v736 = vadd.f32 %v734, %v735
        %v737 = vadd.f32 %v695, %v697
        %v738 = vrot.slane %v737, 4
        %v739 = vadd.f32 %v737, %v738
        %v740 = vrot.slane %v739, 2
        %v741 = vadd.f32 %v739, %v740
        %v742 = vrot.slane %v741, 1
        %v743 = vadd.f32 %v741, %v742
        %v744 = vadd.f32 %v696, %v698
        %v745 = vrot.slane %v744, 4
        %v746 = vadd.f32 %v744, %v745
        %v747 = vrot.slane %v746, 2
        %v748 = vadd.f32 %v746, %v747
        %v749 = vrot.slane %v748, 1
        %v750 = vadd.f32 %v748, %v749
        %v751 = vadd.f32 %v699, %v701
        %v752 = vrot.slane %v751, 4
        %v753 = vadd.f32 %v751, %v752
        %v754 = vrot.slane %v753, 2
        %v755 = vadd.f32 %v753, %v754
        %v756 = vrot.slane %v755, 1
        %v757 = vadd.f32 %v755, %v756
        %v758 = vadd.f32 %v700, %v702
        %v759 = vrot.slane %v758, 4
        %v760 = vadd.f32 %v758, %v759
        %v761 = vrot.slane %v760, 2
        %v762 = vadd.f32 %v760, %v761
        %v763 = vrot.slane %v762, 1
        %v764 = vadd.f32 %v762, %v763
        %v765 = vadd.f32 %v703, %v705
        %v766 = vrot.slane %v765, 4
        %v767 = vadd.f32 %v765, %v766
        %v768 = vrot.slane %v767, 2
        %v769 = vadd.f32 %v767, %v768
        %v770 = vrot.slane %v769, 1
        %v771 = vadd.f32 %v769, %v770
        %v772 = vadd.f32 %v704, %v706
        %v773 = vrot.slane %v772, 4
        %v774 = vadd.f32 %v772, %v773
        %v775 = vrot.slane %v774, 2
        %v776 = vadd.f32 %v774, %v775
        %v777 = vrot.slane %v776, 1
        %v778 = vadd.f32 %v776, %v777
        %v779 = vadd.f32 %v707, %v709
        %v780 = vrot.slane %v779, 4
        %v781 = vadd.f32 %v779, %v780
        %v782 = vrot.slane %v781, 2
        %v783 = vadd.f32 %v781, %v782
        %v784 = vrot.slane %v783, 1
        %v785 = vadd.f32 %v783, %v784
        %v786 = vadd.f32 %v708, %v710
        %v787 = vrot.slane %v786, 4
        %v788 = vadd.f32 %v786, %v787
        %v789 = vrot.slane %v788, 2
        %v790 = vadd.f32 %v788, %v789
        %v791 = vrot.slane %v790, 1
        %v792 = vadd.f32 %v790, %v791
        %v793 = vadd.f32 %v711, %v713
        %v794 = vrot.slane %v793, 4
        %v795 = vadd.f32 %v793, %v794
        %v796 = vrot.slane %v795, 2
        %v797 = vadd.f32 %v795, %v796
        %v798 = vrot.slane %v797, 1
        %v799 = vadd.f32 %v797, %v798
        %v800 = vadd.f32 %v712, %v714
        %v801 = vrot.slane %v800, 4
        %v802 = vadd.f32 %v800, %v801
        %v803 = vrot.slane %v802, 2
        %v804 = vadd.f32 %v802, %v803
        %v805 = vrot.slane %v804, 1
        %v806 = vadd.f32 %v804, %v805
        %v807 = vadd.f32 %v715, %v717
        %v808 = vrot.slane %v807, 4
        %v809 = vadd.f32 %v807, %v808
        %v810 = vrot.slane %v809, 2
        %v811 = vadd.f32 %v809, %v810
        %v812 = vrot.slane %v811, 1
        %v813 = vadd.f32 %v811, %v812
        %v814 = vadd.f32 %v716, %v718
        %v815 = vrot.slane %v814, 4
        %v816 = vadd.f32 %v814, %v815
        %v817 = vrot.slane %v816, 2
        %v818 = vadd.f32 %v816, %v817
        %v819 = vrot.slane %v818, 1
        %v820 = vadd.f32 %v818, %v819
        %v821 = vadd.f32 %v719, %v721
        %v822 = vrot.slane %v821, 4
        %v823 = vadd.f32 %v821, %v822
        %v824 = vrot.slane %v823, 2
        %v825 = vadd.f32 %v823, %v824
        %v826 = vrot.slane %v825, 1
        %v827 = vadd.f32 %v825, %v826
        %v828 = vadd.f32 %v720, %v722
        %v829 = vrot.slane %v828, 4
        %v830 = vadd.f32 %v828, %v829
        %v831 = vrot.slane %v830, 2
        %v832 = vadd.f32 %v830, %v831
        %v833 = vrot.slane %v832, 1
        %v834 = vadd.f32 %v832, %v833
        %v835 = vld [vmem:[#allocation2] sm:$0xff]
        %v836 = vld [vmem:[#allocation2 + $0x8] sm:$0xff]
        %vm853 = vcmask 1041409
        %v854 = vsel %vm853, %v743, %v729
        %vm855 = vcmask 1042434
        %v856 = vsel %vm855, %v757, %v854
        %vm857 = vcmask 1043459
        %v858 = vsel %vm857, %v771, %v856
        %vm859 = vcmask 1044484
        %v860 = vsel %vm859, %v785, %v858
        %vm861 = vcmask 1045509
        %v862 = vsel %vm861, %v799, %v860
        %vm863 = vcmask 1046534
        %v864 = vsel %vm863, %v813, %v862
        %vm865 = vcmask 1047559
        %v866 = vsel %vm865, %v827, %v864
        %v867 = vsel %vm853, %v750, %v736
        %v868 = vsel %vm855, %v764, %v867
        %v869 = vsel %vm857, %v778, %v868
        %v870 = vsel %vm859, %v792, %v869
        %v871 = vsel %vm861, %v806, %v870
        %v872 = vsel %vm863, %v820, %v871
        %v873 = vsel %vm865, %v834, %v872
        %v876 = vadd.f32 %v835, %v866
        %v877 = vadd.f32 %v836, %v873
        %878 = vst [vmem:[#allocation2] sm:$0xff] %v876
        %879 = vst [vmem:[#allocation2 + $0x8] sm:$0xff] %v877
        // Predicated region
        $region41: #{tpu_custom_call.1} parent=27 // pred_check
          %p880 = pneg %p232
        $region42: #{tpu_custom_call.1} parent=27 // pred_check_branch
          %882 = sbr.rel (%p880) target = $region44
        $region43: #{tpu_custom_call.1} parent=27 // pred_region
          %v883 = vld [vmem:[#allocation2] sm:$0xff]
          %v884 = vld [vmem:[#allocation2 + $0x8] sm:$0xff]
          %885 = vst [vmem:[%s228] sm:$0xff] %v883
          %886 = vst [vmem:[%s228 + $0x8] sm:$0xff] %v884
        $region44: #{tpu_custom_call.1} parent=27 // pred_fallthru
          _
        %s887 = sand.u32 %s107, 1
        %s888 = scalar_lea.sflag [#allocation5], %s887
        %s889 = sand.u32 %s107, 1
        %s890 = smul.addr %s889, 16
        %s891 = scalar_lea.vmem [#allocation8], %s890
        // Predicated region
        $region45: #{tpu_custom_call.1} parent=27 // pred_check
          %p892 = pneg %p117
        $region46: #{tpu_custom_call.1} parent=27 // pred_check_branch
          %894 = sbr.rel (%p892) target = $region48
        $region47: #{tpu_custom_call.1} parent=27 // pred_region
          %s895 = smul.u32 2, %s28
          %s897 = ssub.s32 256, 256
          %898 = vsyncadd %s888, %s897
          %s899 = smul.addr %s27, 2
          %s900 = sadd.s32 %s895, %s899
          %s901 = smul.addr %s900, 128
          %s902 = scalar_lea.hbm %s2, %s901
          %s904 = sshll.u32 %s891, 4
          %s905 = int_to_ptr.vmem [resolvable:$true] %s904
          %907 = dma.vmem_to_hbm [thread:$0]  %s905, 256, %s902, %s888
        $region48: #{tpu_custom_call.1} parent=27 // pred_fallthru
          _
      $region28: #{tpu_custom_call.1} parent=5 // pred_fallthru
        _
      %p908 = scmp.le.s32.totalorder 2, %s17
      // Predicated region
      $region49: #{tpu_custom_call.1} parent=5 // pred_check
        %p909 = pneg %p908
      $region50: #{tpu_custom_call.1} parent=5 // pred_check_branch
        %911 = sbr.rel (%p909) target = $region52
      $region51: #{tpu_custom_call.1} parent=5 // pred_region
        %s912 = ssub.s32 %s17, 2
        // Predicated region
        $region53: #{tpu_custom_call.1} parent=51 // pred_check
          %p913 = pneg %p123
        $region54: #{tpu_custom_call.1} parent=51 // pred_check_branch
          %915 = sbr.rel (%p913) target = $region56
        $region55: #{tpu_custom_call.1} parent=51 // pred_region
          %s916 = sand.u32 %s108, 1
          %s917 = scalar_lea.sflag [#allocation5], %s916
          %s918 = sand.u32 %s108, 1
          %s919 = smul.addr %s918, 16
          %s920 = scalar_lea.vmem [#allocation8], %s919
          %921 = dma.done %s917, 256
        $region56: #{tpu_custom_call.1} parent=51 // pred_fallthru
          _
      $region52: #{tpu_custom_call.1} parent=5 // pred_fallthru
        _
    $region6: #{tpu_custom_call.1} parent=1 // loop_footer
      %s21 = sadd.s32 1, %s17
    $region7: #{tpu_custom_call.1} parent=1 // loop_footer_branch
      %16 = sbr.rel target = $region3
    $region8: #{tpu_custom_call.1} parent=1 // loop_exit
      _
    %922 = vsyncpa [#allocation4], 1
    %s923 = scalar_lea.sflag [#allocation4], 1
    %924 = vsyncpa %s923, 1
    %925 = vsyncpa [#allocation7], 1
    %s926 = scalar_lea.sflag [#allocation7], 1
    %927 = vsyncpa %s926, 1
    %928 = vsyncpa [#allocation5], 1
    %s929 = scalar_lea.sflag [#allocation5], 1
    %930 = vsyncpa %s929, 1

</llo_original>
